<compile_context>
chip_gen: v7x
topology: tpu7x:2x2x1
jax: 0.10.0
libtpu: 0.0.40
codegen_flags: <defaults>
</compile_context>

<pallas_src>
import numpy as np

import jax
import jax.numpy as jnp
from jax import lax
from jax.experimental import pallas as pl
from jax.experimental.pallas import tpu as pltpu

A_QMIN, A_QMAX = 0.0, 255.0      # activation: asymmetric uint8
W_QMIN, W_QMAX = -128.0, 127.0   # weight: symmetric int8
F32_EPS = float(np.finfo(np.float32).eps)


def _round_up(v, m):
    return (v + m - 1) // m * m


def _loss_kernel(nvalid_ref, azp_ref, sout_ref,              # SMEM scalars / tables
                 x_ref, w_ref, ref_ref, xinv_ref, wmul_ref,   # VMEM tiles / tables
                 loss_ref):                                   # (1, 1, ncp) loss out
    # grid = (out-feature tile j [parallel], token tile i [parallel]);
    # candidates run in an in-kernel fori_loop bounded by nvalid (no padded grid steps).
    n = nvalid_ref[0]
    lane = lax.broadcasted_iota(jnp.int32, loss_ref.shape, dimension=2)

    def body(k, acc):
        a_zp = azp_ref[k]        # integer-valued activation zero-point (f32, SMEM)
        s_out = sout_ref[k]      # a_scale * w_scale, folded out of the matmul

        # activation: x_q / a_scale = clip(round(x * 1/(cur*a_scale) + zp)) - zp
        xi = jnp.clip(jnp.round(x_ref[...] * xinv_ref[k] + a_zp),
                      A_QMIN, A_QMAX) - a_zp
        # weight:     w_q / w_scale = clip(round(w * cur/w_scale))
        wi = jnp.clip(jnp.round(w_ref[...] * wmul_ref[k]), W_QMIN, W_QMAX)

        # xi, wi are exact small integers -> bf16 cast is lossless; bf16 MXU, f32 accum.
        q = lax.dot_general(xi.astype(jnp.bfloat16), wi.astype(jnp.bfloat16),
                            dimension_numbers=(((1,), (1,)), ((), ())),   # x @ w.T, NT layout
                            preferred_element_type=jnp.float32)
        d = q * s_out - ref_ref[...]
        partial = jnp.sum(d * d)
        return acc + jnp.where(lane == k, partial, 0.0)

    loss_ref[...] = lax.fori_loop(0, n, body,
                                  jnp.zeros(loss_ref.shape, jnp.float32))


def _auto_tiles(BN, O, Cp, ncp, token_tile, out_tile):
    """Pick (tm, to, vmem_limit) from the chip kind and the double-buffered VMEM footprint."""
    try:
        kind = jax.devices()[0].device_kind.lower()
    except Exception:
        kind = ""
    base = 256 if "v5" in kind else 512                       # v5e: 256x256 is already MXU-bound
    # 128 MiB physical VMEM on v5e/v6e; be conservative (64 MiB/TC) on v7x / unknown chips.
    budget = (100 << 20) if (("v5" in kind) or ("v6" in kind)) else (56 << 20)

    tm = _round_up(min(token_tile if token_tile else base, _round_up(BN, 8)), 8)
    to = _round_up(min(out_tile if out_tile else base, _round_up(O, 8)), 8)

    def footprint(a, b):
        dbl = 2 * (a * Cp + b * Cp + a * b)                   # double-buffered x, w, ref tiles
        tbl = 2 * 2 * ncp * Cp                                # xinv + wmul tables (2 bufs each)
        return 4 * (dbl + tbl + 2 * ncp)

    while footprint(tm, to) > budget and max(tm, to) > 128:
        if tm >= to:
            tm = max(128, _round_up(tm // 2, 8))
        else:
            to = max(128, _round_up(to // 2, 8))
    vmem_limit = max(32 << 20, footprint(tm, to) + (6 << 20))
    return tm, to, vmem_limit


def migrator_1d_range_search(x, weight, obs_mask, *, token_tile=None, out_tile=None):
    """x: (B, N, C) activations, weight: (O, C) fc1 weight, obs_mask: (B, N) {0,1}.
    Returns the per-channel migration scale (C,) of the best symmetric range."""
    B, N, C = x.shape
    O = weight.shape[0]
    BN = B * N

    x2d = jnp.asarray(x, jnp.float32).reshape(BN, C)
    w = jnp.asarray(weight, jnp.float32)
    mask = jnp.asarray(obs_mask, jnp.float32).reshape(BN)

    # --- stats (MigratorBase.__init__), from the *unmasked* activation / weight ---
    cmx = jnp.max(x2d, axis=0)                 # (C,)
    cmn = jnp.min(x2d, axis=0)
    col_min = jnp.min(w, axis=0)               # (C,) per-channel weight extrema (once)
    col_max = jnp.max(w, axis=0)
    amx_d, amn_d = jnp.max(x2d), jnp.min(x2d)
    amx, amn = (float(v) for v in jax.device_get((amx_d, amn_d)))   # single host sync
    amx, amn = max(amx, 0.0), min(amn, 0.0)

    # --- candidate ranges (search_migrate_range_1D), pure python floats ---
    num = max(100, int(amx / 0.5))
    bound_lo, bound_hi = 1.0, max(-amn, amx)
    step = (bound_hi - bound_lo) / num
    sts = []
    st = bound_hi
    while st >= bound_lo and len(sts) <= num + 2:     # +2 guard against fp drift
        sts.append(st)
        st -= step
    if not sts:                                        # degenerate: fall back to full range
        sts = [bound_hi]
    n_real = len(sts)
    ncp = _round_up(n_real, 128)                       # lane-dense losses + compile bucket
    st_arr = jnp.asarray(np.asarray(sts + [sts[0]] * (ncp - n_real), np.float32))

    # --- per-candidate migration scale and qparams (tiny (ncp, C) / (ncp,) work) ---
    st_col = st_arr[:, None]                                            # (ncp, 1)
    cur = jnp.maximum(
        jnp.where(cmx[None, :] > st_col, cmx[None, :] / st_col, 1.0),
        jnp.where(cmn[None, :] < -st_col, cmn[None, :] / (-st_col), 1.0))   # (ncp, C)
    a_scale = jnp.maximum(2.0 * st_arr / (A_QMAX - A_QMIN), F32_EPS)        # (ncp,)
    a_zp = jnp.clip(jnp.round(A_QMIN + st_arr / a_scale), A_QMIN, A_QMAX)   # (ncp,)
    w_min = jnp.minimum(jnp.min(col_min[None, :] * cur, axis=1), 0.0)       # (ncp,)
    w_max = jnp.maximum(jnp.max(col_max[None, :] * cur, axis=1), 0.0)
    w_scale = jnp.maximum(jnp.maximum(-w_min, w_max) / ((W_QMAX - W_QMIN) / 2.0),
                          F32_EPS)
    xinv = 1.0 / (cur * a_scale[:, None])      # folded 1/(cur*a_scale)   (ncp, C)
    wmul = cur / w_scale[:, None]              # folded cur/w_scale       (ncp, C)
    s_out = a_scale * w_scale                  # (ncp,)

    # --- pre-mask + pad to TPU-friendly tiles ---
    n_obs = jnp.maximum(jnp.sum(mask), 1.0)    # guard: no observed tokens -> no NaN
    xm = x2d * mask[:, None]                   # zeroed rows contribute exactly 0 loss

    Cp = _round_up(C, 128)
    tm, to, vmem_limit = _auto_tiles(BN, O, Cp, ncp, token_tile, out_tile)
    BNp = _round_up(BN, tm)
    Op = _round_up(O, to)

    xm = jnp.pad(xm, ((0, BNp - BN), (0, Cp - C)))
    wp = jnp.pad(w, ((0, Op - O), (0, Cp - C)))
    xinv_p = jnp.pad(xinv, ((0, 0), (0, Cp - C))).reshape(ncp, 1, Cp)
    wmul_p = jnp.pad(wmul, ((0, 0), (0, Cp - C))).reshape(ncp, 1, Cp)

    # fp32 reference output computed ONCE in the wrapper at true f32 precision
    # (matches the torch fp32 baseline; removes the slow f32 MXU pass from the hot loop).
    yref = lax.dot_general(xm, wp,
                           dimension_numbers=(((1,), (1,)), ((), ())),
                           precision=lax.Precision.HIGHEST,
                           preferred_element_type=jnp.float32)          # (BNp, Op)

    J, I = Op // to, BNp // tm

    losses_tiled = pl.pallas_call(
        _loss_kernel,
        out_shape=jax.ShapeDtypeStruct((J, I, ncp), jnp.float32),
        grid_spec=pltpu.PrefetchScalarGridSpec(
            num_scalar_prefetch=0,
            grid=(J, I),
            in_specs=[
                pl.BlockSpec(memory_space=pltpu.MemorySpace.SMEM),       # nvalid (1,) i32
                pl.BlockSpec(memory_space=pltpu.MemorySpace.SMEM),       # a_zp   (ncp,) f32
                pl.BlockSpec(memory_space=pltpu.MemorySpace.SMEM),       # s_out  (ncp,) f32
                pl.BlockSpec((tm, Cp), lambda j, i: (i, 0)),             # x tile
                pl.BlockSpec((to, Cp), lambda j, i: (j, 0)),             # w tile (natural O,C)
                pl.BlockSpec((tm, to), lambda j, i: (i, j)),             # fp32 reference tile
                pl.BlockSpec((ncp, 1, Cp), lambda j, i: (0, 0, 0)),      # xinv table (loaded once)
                pl.BlockSpec((ncp, 1, Cp), lambda j, i: (0, 0, 0)),      # wmul table (loaded once)
            ],
            out_specs=pl.BlockSpec((1, 1, ncp), lambda j, i: (j, i, 0)),
        ),
        compiler_params=pltpu.CompilerParams(
            dimension_semantics=("parallel", "parallel"),
            vmem_limit_bytes=int(vmem_limit),
        ),
    )(jnp.asarray([n_real], jnp.int32),
      a_zp.astype(jnp.float32),
      s_out.astype(jnp.float32),
      xm, wp, yref, xinv_p, wmul_p)

    # epilogue in plain JAX: reduce the per-tile losses, normalize, argmin, best scale
    losses = jnp.sum(losses_tiled, axis=(0, 1))[:n_real] / n_obs
    best = jnp.argmin(losses)          # first minimum wins, as in the torch while-loop
    return cur[best, :]                # == get_best_scale(-st_best, st_best)


if __name__ == "__main__":
    key = jax.random.PRNGKey(0)
    B, N, C, O = 2, 8, 32, 64   # batch, seq, hidden (in-features), fc1 out-features
    k1, k2 = jax.random.split(key, 2)

    x = jax.random.normal(k1, (B, N, C), dtype=jnp.float32)
    # inject a few outlier channels (the setting OS+ migration targets)
    ch_scale = jnp.ones((C,), jnp.float32).at[3].set(8.0).at[17].set(12.0)
    x = x * ch_scale
    weight = 0.1 * jax.random.normal(k2, (O, C), dtype=jnp.float32)

    # observation mask: first `length` tokens of each sequence are observed
    lengths = jnp.array([6, 5], dtype=jnp.int32)
    obs_mask = (jnp.arange(N)[None, :] < lengths[:, None]).astype(jnp.int32)

    scale = migrator_1d_range_search(x, weight, obs_mask)
    scale = jax.block_until_ready(scale)

    assert scale.shape == (C,)
    assert bool(jnp.all(jnp.isfinite(scale)))
    assert bool(jnp.all(scale >= 1.0))
    print("KERNEL_OK")
</pallas_src>

<mosaic_0001>
module attributes {stable_mosaic.version = 11 : i64} {
  func.func @_loss_kernel(%arg0: i32, %arg1: i32, %arg2: memref<1xi32, #tpu.memory_space<smem>>, %arg3: memref<128xf32, #tpu.memory_space<smem>>, %arg4: memref<128xf32, #tpu.memory_space<smem>>, %arg5: memref<16x128xf32, #tpu.memory_space<vmem>>, %arg6: memref<64x128xf32, #tpu.memory_space<vmem>>, %arg7: memref<16x64xf32, #tpu.memory_space<vmem>>, %arg8: memref<128x1x128xf32, #tpu.memory_space<vmem>>, %arg9: memref<128x1x128xf32, #tpu.memory_space<vmem>>, %arg10: memref<1x1x128xf32, #tpu.memory_space<vmem>>) attributes {dimension_semantics = [#tpu.dimension_semantics<parallel>, #tpu.dimension_semantics<parallel>], iteration_bounds = array<i64: 1, 1>, scalar_prefetch = 0 : i64, scratch_operands = 0 : i64, tpu.core_type = #tpu.core_type<tc>, window_params = [{transform_indices = @transform_0, window_bounds = array<i64: 1>}, {transform_indices = @transform_1, window_bounds = array<i64: 128>}, {transform_indices = @transform_2, window_bounds = array<i64: 128>}, {transform_indices = @transform_3, window_bounds = array<i64: 16, 128>}, {transform_indices = @transform_4, window_bounds = array<i64: 64, 128>}, {transform_indices = @transform_5, window_bounds = array<i64: 16, 64>}, {pipeline_mode = #tpu.pipeline_mode<synchronous>, transform_indices = @transform_6, window_bounds = array<i64: 128, 1, 128>}, {pipeline_mode = #tpu.pipeline_mode<synchronous>, transform_indices = @transform_7, window_bounds = array<i64: 128, 1, 128>}, {transform_indices = @transform_8, window_bounds = array<i64: 1, 1, 128>}]} {
    %c0 = arith.constant 0 : index
    %0 = memref.load %arg2[%c0] : memref<1xi32, #tpu.memory_space<smem>>
    %1 = tpu.iota {dimensions = array<i32: 2>} : vector<1x1x128xi32>
    %cst = arith.constant 0.000000e+00 : f32
    %2 = vector.broadcast %cst : f32 to vector<1x1x128xf32>
    %c0_i32 = arith.constant 0 : i32
    %3 = arith.subi %0, %c0_i32 : i32
    %4 = arith.addi %c0_i32, %3 : i32
    %c1_i32 = arith.constant 1 : i32
    %5 = scf.for %arg11 = %c0_i32 to %4 step %c1_i32 iter_args(%arg12 = %2) -> (vector<1x1x128xf32>)  : i32 {
      %7 = arith.index_cast %arg11 : i32 to index
      %8 = memref.load %arg3[%7] : memref<128xf32, #tpu.memory_space<smem>>
      %9 = arith.index_cast %arg11 : i32 to index
      %10 = memref.load %arg4[%9] : memref<128xf32, #tpu.memory_space<smem>>
      %c0_3 = arith.constant 0 : index
      %c0_4 = arith.constant 0 : index
      %11 = vector.load %arg5[%c0_3, %c0_4] : memref<16x128xf32, #tpu.memory_space<vmem>>, vector<16x128xf32>
      %12 = arith.index_cast %arg11 : i32 to index
      %c0_5 = arith.constant 0 : index
      %c0_6 = arith.constant 0 : index
      %13 = vector.load %arg8[%12, %c0_5, %c0_6] : memref<128x1x128xf32, #tpu.memory_space<vmem>>, vector<1x1x128xf32>
      %14 = vector.shape_cast %13 : vector<1x1x128xf32> to vector<1x128xf32>
      %15 = vector.broadcast %14 : vector<1x128xf32> to vector<16x128xf32>
      %16 = arith.mulf %11, %15 : vector<16x128xf32>
      %17 = vector.broadcast %8 : f32 to vector<16x128xf32>
      %18 = arith.addf %16, %17 : vector<16x128xf32>
      %19 = math.roundeven %18 : vector<16x128xf32>
      %cst_7 = arith.constant 0.000000e+00 : f32
      %cst_8 = arith.constant 2.550000e+02 : f32
      %20 = vector.broadcast %cst_7 : f32 to vector<16x128xf32>
      %21 = arith.maximumf %20, %19 : vector<16x128xf32>
      %22 = vector.broadcast %cst_8 : f32 to vector<16x128xf32>
      %23 = arith.minimumf %22, %21 : vector<16x128xf32>
      %24 = vector.broadcast %8 : f32 to vector<16x128xf32>
      %25 = arith.subf %23, %24 : vector<16x128xf32>
      %c0_9 = arith.constant 0 : index
      %c0_10 = arith.constant 0 : index
      %26 = vector.load %arg6[%c0_9, %c0_10] : memref<64x128xf32, #tpu.memory_space<vmem>>, vector<64x128xf32>
      %27 = arith.index_cast %arg11 : i32 to index
      %c0_11 = arith.constant 0 : index
      %c0_12 = arith.constant 0 : index
      %28 = vector.load %arg9[%27, %c0_11, %c0_12] : memref<128x1x128xf32, #tpu.memory_space<vmem>>, vector<1x1x128xf32>
      %29 = vector.shape_cast %28 : vector<1x1x128xf32> to vector<1x128xf32>
      %30 = vector.broadcast %29 : vector<1x128xf32> to vector<64x128xf32>
      %31 = arith.mulf %26, %30 : vector<64x128xf32>
      %32 = math.roundeven %31 : vector<64x128xf32>
      %cst_13 = arith.constant -1.280000e+02 : f32
      %cst_14 = arith.constant 1.270000e+02 : f32
      %33 = vector.broadcast %cst_13 : f32 to vector<64x128xf32>
      %34 = arith.maximumf %33, %32 : vector<64x128xf32>
      %35 = vector.broadcast %cst_14 : f32 to vector<64x128xf32>
      %36 = arith.minimumf %35, %34 : vector<64x128xf32>
      %37 = arith.truncf %25 : vector<16x128xf32> to vector<16x128xbf16>
      %38 = arith.truncf %36 : vector<64x128xf32> to vector<64x128xbf16>
      %cst_15 = arith.constant dense<0.000000e+00> : vector<16x64xf32>
      %39 = tpu.matmul %37, %38, %cst_15 {dimension_numbers = #tpu.dot_dimension_numbers<[1], [1], [0], [0], [0, 0, 1, 0], [], []>} : vector<16x128xbf16>, vector<64x128xbf16>, vector<16x64xf32> -> vector<16x64xf32>
      %40 = vector.broadcast %10 : f32 to vector<16x64xf32>
      %41 = arith.mulf %39, %40 : vector<16x64xf32>
      %c0_16 = arith.constant 0 : index
      %c0_17 = arith.constant 0 : index
      %42 = vector.load %arg7[%c0_16, %c0_17] : memref<16x64xf32, #tpu.memory_space<vmem>>, vector<16x64xf32>
      %43 = arith.subf %41, %42 : vector<16x64xf32>
      %44 = arith.mulf %43, %43 : vector<16x64xf32>
      %45 = vector.shape_cast %44 : vector<16x64xf32> to vector<1x16x64xf32>
      %cst_18 = arith.constant dense<0.000000e+00> : vector<1xf32>
      %46 = vector.multi_reduction <add>, %45, %cst_18 [1, 2] : vector<1x16x64xf32> to vector<1xf32>
      %47 = vector.shape_cast %46 : vector<1xf32> to vector<1x1x1xf32>
      %48 = vector.extract %47[0, 0, 0] : f32 from vector<1x1x1xf32>
      %49 = vector.broadcast %arg11 : i32 to vector<1x1x128xi32>
      %50 = arith.cmpi eq, %1, %49 : vector<1x1x128xi32>
      %cst_19 = arith.constant 0.000000e+00 : f32
      %51 = vector.broadcast %48 : f32 to vector<1x1x128xf32>
      %52 = vector.broadcast %cst_19 : f32 to vector<1x1x128xf32>
      %53 = arith.select %50, %51, %52 : vector<1x1x128xi1>, vector<1x1x128xf32>
      %54 = arith.addf %arg12, %53 : vector<1x1x128xf32>
      scf.yield %54 : vector<1x1x128xf32>
    }
    %c0_0 = arith.constant 0 : index
    %c0_1 = arith.constant 0 : index
    %c0_2 = arith.constant 0 : index
    %6 = vector.load %arg10[%c0_0, %c0_1, %c0_2] : memref<1x1x128xf32, #tpu.memory_space<vmem>>, vector<1x1x128xf32>
    tpu.vector_store %arg10[%c0_0, %c0_1, %c0_2], %5 {strides = array<i32>} : memref<1x1x128xf32, #tpu.memory_space<vmem>>, vector<1x1x128xf32>,
    return
  }
  func.func @transform_0(%arg0: i32, %arg1: i32) -> i32 {
    %c0_i32 = arith.constant 0 : i32
    %c0_i32_0 = arith.constant 0 : i32
    return %c0_i32 : i32
  }
  func.func @transform_1(%arg0: i32, %arg1: i32) -> i32 {
    %c0_i32 = arith.constant 0 : i32
    %c0_i32_0 = arith.constant 0 : i32
    return %c0_i32 : i32
  }
  func.func @transform_2(%arg0: i32, %arg1: i32) -> i32 {
    %c0_i32 = arith.constant 0 : i32
    %c0_i32_0 = arith.constant 0 : i32
    return %c0_i32 : i32
  }
  func.func @transform_3(%arg0: i32, %arg1: i32) -> (i32, i32) {
    %c0_i32 = arith.constant 0 : i32
    %c0_i32_0 = arith.constant 0 : i32
    return %arg1, %c0_i32 : i32, i32
  }
  func.func @transform_4(%arg0: i32, %arg1: i32) -> (i32, i32) {
    %c0_i32 = arith.constant 0 : i32
    %c0_i32_0 = arith.constant 0 : i32
    return %arg0, %c0_i32 : i32, i32
  }
  func.func @transform_5(%arg0: i32, %arg1: i32) -> (i32, i32) {
    %c0_i32 = arith.constant 0 : i32
    return %arg1, %arg0 : i32, i32
  }
  func.func @transform_6(%arg0: i32, %arg1: i32) -> (i32, i32, i32) {
    %c0_i32 = arith.constant 0 : i32
    %c0_i32_0 = arith.constant 0 : i32
    %c0_i32_1 = arith.constant 0 : i32
    %c0_i32_2 = arith.constant 0 : i32
    return %c0_i32, %c0_i32_0, %c0_i32_1 : i32, i32, i32
  }
  func.func @transform_7(%arg0: i32, %arg1: i32) -> (i32, i32, i32) {
    %c0_i32 = arith.constant 0 : i32
    %c0_i32_0 = arith.constant 0 : i32
    %c0_i32_1 = arith.constant 0 : i32
    %c0_i32_2 = arith.constant 0 : i32
    return %c0_i32, %c0_i32_0, %c0_i32_1 : i32, i32, i32
  }
  func.func @transform_8(%arg0: i32, %arg1: i32) -> (i32, i32, i32) {
    %c0_i32 = arith.constant 0 : i32
    %c0_i32_0 = arith.constant 0 : i32
    return %arg0, %arg1, %c0_i32 : i32, i32, i32
  }
}

</mosaic_0001>

<llo_original>
// kernel: tpu_custom_call.1
$region0: #{tpu_custom_call.1}
  #allocation0 [shape = 'u32[]', space=smem, size = 0x4, offset = 0x4, fixed_abs, tag = 'smem constant byte address 0x4 - core index']
  #allocation1 [shape = 'u32[144,128]{1,0:T(1,128)}', space=vmem, size = 0x12000, scoped, tag = 'internal scratch']
  #allocation2 [shape = 's32[1]{0:T(128)S(6)}', space=smem, size = 0x200, scoped, tag = 'scoped memory for tpu_custom_call.1']
  %s0 = inlined_call_operand.<no memory space> [shape: s32[1], index: 0, kind: input, shape index: {}]
  %s1 = inlined_call_operand.vmem [shape: f32[128], index: 1, kind: input, shape index: {}]
  %s2 = inlined_call_operand.vmem [shape: f32[128], index: 2, kind: input, shape index: {}]
  %s3 = inlined_call_operand.hbm [shape: f32[16,128], index: 3, kind: input, shape index: {}]
  %s4 = inlined_call_operand.hbm [shape: f32[64,128], index: 4, kind: input, shape index: {}]
  %s5 = inlined_call_operand.vmem [shape: f32[16,64], index: 5, kind: input, shape index: {}]
  %s6 = inlined_call_operand.hbm [shape: f32[128,1,128], index: 6, kind: input, shape index: {}]
  %s7 = inlined_call_operand.hbm [shape: f32[128,1,128], index: 7, kind: input, shape index: {}]
  %s8 = inlined_call_operand.hbm [shape: f32[1,1,128], index: 8, kind: output, shape index: {}]
  %s9 = sld [smem:[#allocation0]]
  $region73: #{tpu_custom_call.1} parent=0
    _
  %s11 = ssub.s32 1, %s9
  %s12 = scalar_select 0, %s11, %s9
  %13 = sst [smem:[#allocation2]] %s0
  $region1: #{tpu_custom_call.1} parent=0
    #allocation3 [shape = 'u8[512]{0}', space=smem, size = 0x200, scoped, tag = 'input window, operand 1, single buffered']
    #allocation4 [shape = 's32[1]{0}', space=sflag, size = 0x4, scoped, tag = 'scoped memory for tpu_custom_call.1']
    #allocation5 [shape = 's32[1]{0}', space=sflag, size = 0x4, scoped, tag = 'scoped memory for tpu_custom_call.1']
    #allocation6 [shape = 's32[1]{0}', space=sflag, size = 0x4, scoped, tag = 'scoped memory for tpu_custom_call.1']
    #allocation7 [shape = 'u8[512]{0}', space=smem, size = 0x200, scoped, tag = 'input window, operand 2, single buffered']
    #allocation8 [shape = 's32[1]{0}', space=sflag, size = 0x4, scoped, tag = 'scoped memory for tpu_custom_call.1']
    #allocation9 [shape = 'u8[8192]{0}', space=vmem, size = 0x2000, scoped, tag = 'input window, operand 3, single buffered']
    #allocation10 [shape = 'u8[32768]{0}', space=vmem, size = 0x8000, scoped, tag = 'input window, operand 4, single buffered']
    #allocation11 [shape = 's32[1]{0}', space=sflag, size = 0x4, scoped, tag = 'scoped memory for tpu_custom_call.1']
    #allocation12 [shape = 'u8[65536]{0}', space=vmem, size = 0x10000, scoped, tag = 'input window, operand 6, single buffered']
    #allocation13 [shape = 'u8[65536]{0}', space=vmem, size = 0x10000, scoped, tag = 'input window, operand 7, single buffered']
    #allocation14 [shape = 's32[1]{0}', space=sflag, size = 0x4, scoped, tag = 'scoped memory for tpu_custom_call.1']
    #allocation15 [shape = 'u8[512]{0}', space=vmem, size = 0x400, scoped, tag = 'output window, operand 0, single buffered']
    %14 = vsyncpa [#allocation6], 0
    %15 = vsyncpa [#allocation8], 0
    %16 = vsyncpa [#allocation4], 0
    %17 = vsyncpa [#allocation11], 0
    %18 = vsyncpa [#allocation14], 0
    %19 = vsyncpa [#allocation5], 0
    // Predicated region
    $region2: #{tpu_custom_call.1} parent=1 // pred_check
      _
    $region3: #{tpu_custom_call.1} parent=1 // pred_check_branch
      %21 = sbr.rel (0) target = $region5
    $region4: #{tpu_custom_call.1} parent=1 // pred_region
      _
    $region5: #{tpu_custom_call.1} parent=1 // pred_fallthru
      _
    // Predicated region
    $region6: #{tpu_custom_call.1} parent=1 // pred_check
      _
    $region7: #{tpu_custom_call.1} parent=1 // pred_check_branch
      %23 = sbr.rel (0) target = $region9
    $region8: #{tpu_custom_call.1} parent=1 // pred_region
      %s25 = ssub.s32 16, 16
      %26 = vsyncadd [#allocation6], %s25
      %s28 = sshll.u32 %s1, 4
      %s29 = int_to_ptr.vmem [resolvable:$true] %s28
      %31 = dma.vmem_to_smem %s29, 16, [#allocation3], [#allocation6]
    $region9: #{tpu_custom_call.1} parent=1 // pred_fallthru
      _
    // Predicated region
    $region10: #{tpu_custom_call.1} parent=1 // pred_check
      _
    $region11: #{tpu_custom_call.1} parent=1 // pred_check_branch
      %33 = sbr.rel (0) target = $region13
    $region12: #{tpu_custom_call.1} parent=1 // pred_region
      %s35 = ssub.s32 16, 16
      %36 = vsyncadd [#allocation8], %s35
      %s38 = sshll.u32 %s2, 4
      %s39 = int_to_ptr.vmem [resolvable:$true] %s38
      %41 = dma.vmem_to_smem %s39, 16, [#allocation7], [#allocation8]
    $region13: #{tpu_custom_call.1} parent=1 // pred_fallthru
      _
    // Predicated region
    $region14: #{tpu_custom_call.1} parent=1 // pred_check
      _
    $region15: #{tpu_custom_call.1} parent=1 // pred_check_branch
      %43 = sbr.rel (0) target = $region17
    $region16: #{tpu_custom_call.1} parent=1 // pred_region
      %s45 = ssub.s32 256, 256
      %46 = vsyncadd [#allocation4], %s45
      %s47 = sshll.u32 [#allocation9], 4
      %s48 = int_to_ptr.vmem [resolvable:$true] %s47
      %53 = dma.hbm_to_vmem [thread:$0]  %s3, 256, %s48, [#allocation4], 128, 128, 8
    $region17: #{tpu_custom_call.1} parent=1 // pred_fallthru
      _
    // Predicated region
    $region18: #{tpu_custom_call.1} parent=1 // pred_check
      _
    $region19: #{tpu_custom_call.1} parent=1 // pred_check_branch
      %55 = sbr.rel (0) target = $region21
    $region20: #{tpu_custom_call.1} parent=1 // pred_region
      %s57 = ssub.s32 1024, 1024
      %58 = vsyncadd [#allocation11], %s57
      %s59 = sshll.u32 [#allocation10], 4
      %s60 = int_to_ptr.vmem [resolvable:$true] %s59
      %65 = dma.hbm_to_vmem [thread:$0]  %s4, 1024, %s60, [#allocation11], 128, 128, 8
    $region21: #{tpu_custom_call.1} parent=1 // pred_fallthru
      _
    // Predicated region
    $region22: #{tpu_custom_call.1} parent=1 // pred_check
      _
    $region23: #{tpu_custom_call.1} parent=1 // pred_check_branch
      %67 = sbr.rel (0) target = $region25
    $region24: #{tpu_custom_call.1} parent=1 // pred_region
      _
    $region25: #{tpu_custom_call.1} parent=1 // pred_fallthru
      _
    // Predicated region
    $region26: #{tpu_custom_call.1} parent=1 // pred_check
      _
    $region27: #{tpu_custom_call.1} parent=1 // pred_check_branch
      %69 = sbr.rel (0) target = $region29
    $region28: #{tpu_custom_call.1} parent=1 // pred_region
      %s71 = ssub.s32 2048, 2048
      %72 = vsyncadd [#allocation11], %s71
      %s73 = sshll.u32 [#allocation12], 4
      %s74 = int_to_ptr.vmem [resolvable:$true] %s73
      %79 = dma.hbm_to_vmem [thread:$0]  %s6, 2048, %s74, [#allocation11], 16, 16, 1
    $region29: #{tpu_custom_call.1} parent=1 // pred_fallthru
      _
    // Predicated region
    $region30: #{tpu_custom_call.1} parent=1 // pred_check
      _
    $region31: #{tpu_custom_call.1} parent=1 // pred_check_branch
      %81 = sbr.rel (0) target = $region33
    $region32: #{tpu_custom_call.1} parent=1 // pred_region
      %s83 = ssub.s32 2048, 2048
      %84 = vsyncadd [#allocation14], %s83
      %s85 = sshll.u32 [#allocation13], 4
      %s86 = int_to_ptr.vmem [resolvable:$true] %s85
      %91 = dma.hbm_to_vmem [thread:$0]  %s7, 2048, %s86, [#allocation14], 16, 16, 1
    $region33: #{tpu_custom_call.1} parent=1 // pred_fallthru
      _
    // Predicated region
    $region34: #{tpu_custom_call.1} parent=1 // pred_check
      _
    $region35: #{tpu_custom_call.1} parent=1 // pred_check_branch
      %93 = sbr.rel (0) target = $region37
    $region36: #{tpu_custom_call.1} parent=1 // pred_region
      %94 = dma.done [#allocation6], 16
    $region37: #{tpu_custom_call.1} parent=1 // pred_fallthru
      _
    // Predicated region
    $region38: #{tpu_custom_call.1} parent=1 // pred_check
      _
    $region39: #{tpu_custom_call.1} parent=1 // pred_check_branch
      %96 = sbr.rel (0) target = $region41
    $region40: #{tpu_custom_call.1} parent=1 // pred_region
      %97 = dma.done [#allocation8], 16
    $region41: #{tpu_custom_call.1} parent=1 // pred_fallthru
      _
    // Predicated region
    $region42: #{tpu_custom_call.1} parent=1 // pred_check
      _
    $region43: #{tpu_custom_call.1} parent=1 // pred_check_branch
      %99 = sbr.rel (0) target = $region45
    $region44: #{tpu_custom_call.1} parent=1 // pred_region
      %100 = dma.done [#allocation4], 256
    $region45: #{tpu_custom_call.1} parent=1 // pred_fallthru
      _
    // Predicated region
    $region46: #{tpu_custom_call.1} parent=1 // pred_check
      _
    $region47: #{tpu_custom_call.1} parent=1 // pred_check_branch
      %102 = sbr.rel (0) target = $region49
    $region48: #{tpu_custom_call.1} parent=1 // pred_region
      %103 = dma.done [#allocation11], 1024
    $region49: #{tpu_custom_call.1} parent=1 // pred_fallthru
      _
    // Predicated region
    $region50: #{tpu_custom_call.1} parent=1 // pred_check
      _
    $region51: #{tpu_custom_call.1} parent=1 // pred_check_branch
      %105 = sbr.rel (0) target = $region53
    $region52: #{tpu_custom_call.1} parent=1 // pred_region
      %106 = dma.done [#allocation11], 2048
    $region53: #{tpu_custom_call.1} parent=1 // pred_fallthru
      _
    // Predicated region
    $region54: #{tpu_custom_call.1} parent=1 // pred_check
      _
    $region55: #{tpu_custom_call.1} parent=1 // pred_check_branch
      %108 = sbr.rel (0) target = $region57
    $region56: #{tpu_custom_call.1} parent=1 // pred_region
      %109 = dma.done [#allocation14], 2048
    $region57: #{tpu_custom_call.1} parent=1 // pred_fallthru
      _
    %110 = sfence
    %s112 = sld [smem:[#allocation2]]
    %v113 = vlaneseq
    %v114 = vand.u32 %v113, 127
    // While loop
    $region58: #{tpu_custom_call.1} parent=1 // loop_pre_header
      _
    $region59: #{tpu_custom_call.1} parent=1 // loop_header
      %s116 = sphi 0, %s118
      %p117 = scmp.ge.s32.totalorder %s116, %s112
      %v121 = vphi 0.0, %v267
    $region60: #{tpu_custom_call.1} parent=1 // loop_header_branch
      %120 = sbr.rel (%p117) target = $region64
    $region61: #{tpu_custom_call.1} parent=1 // loop_body
      %s122 = sld [smem:[#allocation3 + %s116]]
      %s123 = sld [smem:[#allocation7 + %s116]]
      %v124 = vld [vmem:[#allocation9] sm:$0xff]
      %v125 = vld [vmem:[#allocation9 + $0x8] sm:$0xff]
      %s126 = scalar_lea.vmem [#allocation12], %s116
      %v127 = vld [vmem:[%s126] sm:$0x1]
      %v129 = vlaneseq
      %v130 = vshrl.u32 %v129, 7
      %v131 = vsub.s32 0, %v130
      %v132 = vrot.slane %v127, %v131
      %v134 = vmul.f32 %v124, %v132
      %v135 = vmul.f32 %v125, %v132
      %v136 = vstv %s122
      %v137 = vadd.f32 %v134, %v136
      %v138 = vadd.f32 %v135, %v136
      %v139 = vround.ne.pseudo %v137
      %v140 = vround.ne.pseudo %v138
      %v141 = vmax.f32 %v139, 0.0
      %v142 = vmax.f32 %v140, 0.0
      %v143 = vmin.f32 %v141, 255.0
      %v144 = vmin.f32 %v142, 255.0
      %v145 = vsub.f32 %v143, %v136
      %v146 = vsub.f32 %v144, %v136
      %v147 = vld [vmem:[#allocation10] sm:$0xff]
      %v148 = vld [vmem:[#allocation10 + $0x8] sm:$0xff]
      %v149 = vld [vmem:[#allocation10 + $0x10] sm:$0xff]
      %v150 = vld [vmem:[#allocation10 + $0x18] sm:$0xff]
      %v151 = vld [vmem:[#allocation10 + $0x20] sm:$0xff]
      %v152 = vld [vmem:[#allocation10 + $0x28] sm:$0xff]
      %v153 = vld [vmem:[#allocation10 + $0x30] sm:$0xff]
      %v154 = vld [vmem:[#allocation10 + $0x38] sm:$0xff]
      %s155 = scalar_lea.vmem [#allocation13], %s116
      %v156 = vld [vmem:[%s155] sm:$0x1]
      %v158 = vlaneseq
      %v159 = vshrl.u32 %v158, 7
      %v160 = vsub.s32 0, %v159
      %v161 = vrot.slane %v156, %v160
      %v163 = vmul.f32 %v147, %v161
      %v164 = vmul.f32 %v148, %v161
      %v165 = vmul.f32 %v149, %v161
      %v166 = vmul.f32 %v150, %v161
      %v167 = vmul.f32 %v151, %v161
      %v168 = vmul.f32 %v152, %v161
      %v169 = vmul.f32 %v153, %v161
      %v170 = vmul.f32 %v154, %v161
      %v171 = vround.ne.pseudo %v163
      %v172 = vround.ne.pseudo %v164
      %v173 = vround.ne.pseudo %v165
      %v174 = vround.ne.pseudo %v166
      %v175 = vround.ne.pseudo %v167
      %v176 = vround.ne.pseudo %v168
      %v177 = vround.ne.pseudo %v169
      %v178 = vround.ne.pseudo %v170
      %v179 = vmax.f32 %v171, -128.0
      %v180 = vmax.f32 %v172, -128.0
      %v181 = vmax.f32 %v173, -128.0
      %v182 = vmax.f32 %v174, -128.0
      %v183 = vmax.f32 %v175, -128.0
      %v184 = vmax.f32 %v176, -128.0
      %v185 = vmax.f32 %v177, -128.0
      %v186 = vmax.f32 %v178, -128.0
      %v187 = vmin.f32 %v179, 127.0
      %v188 = vmin.f32 %v180, 127.0
      %v189 = vmin.f32 %v181, 127.0
      %v190 = vmin.f32 %v182, 127.0
      %v191 = vmin.f32 %v183, 127.0
      %v192 = vmin.f32 %v184, 127.0
      %v193 = vmin.f32 %v185, 127.0
      %v194 = vmin.f32 %v186, 127.0
      %v195 = vpack.c.bf16 %v146, %v145
      %v196 = vpack.c.bf16 %v188, %v187
      %v197 = vpack.c.bf16 %v190, %v189
      %v198 = vpack.c.bf16 %v192, %v191
      %v199 = vpack.c.bf16 %v194, %v193
      %200 = vmatprep.subr.bf16.mxu0 0
      %201 = vmatpush1.bf16.xpose.msra.mxu0 %v196
      %202 = vmatprep.subr.bf16.mxu0 0
      %203 = vmatpush1.bf16.xpose.msra.mxu0 %v197
      %204 = vmatprep.subr.bf16.mxu0 0
      %205 = vmatpush1.bf16.xpose.msra.mxu0 %v198
      %206 = vmatprep.subr.bf16.mxu0 0
      %207 = vmatpush1.bf16.xpose.msra.mxu0 %v199
      %208 = vmatprep.subr.bf16.mxu0 0
      %209 = vmatpush1.bf16.xpose.msra.mxu0 0
      %210 = vmatprep.subr.bf16.mxu0 0
      %211 = vmatpush1.bf16.xpose.msra.mxu0 0
      %212 = vmatprep.subr.bf16.mxu0 0
      %213 = vmatpush1.bf16.xpose.msra.mxu0 0
      %214 = vmatprep.subr.bf16.mxu0 0
      %215 = vmatpush1.bf16.xpose.msra.mxu0 0
      %216 = vmatprep.subr.bf16.mxu0 0
      %217 = vmatpush1.bf16.xpose.msra.mxu0 0
      %218 = vmatprep.subr.bf16.mxu0 0
      %219 = vmatpush1.bf16.xpose.msra.mxu0 0
      %220 = vmatprep.subr.bf16.mxu0 0
      %221 = vmatpush1.bf16.xpose.msra.mxu0 0
      %222 = vmatprep.subr.bf16.mxu0 0
      %223 = vmatpush1.bf16.xpose.msra.mxu0 0
      %224 = vmatprep.subr.bf16.mxu0 0
      %225 = vmatpush1.bf16.xpose.msra.mxu0 0
      %226 = vmatprep.subr.bf16.mxu0 0
      %227 = vmatpush1.bf16.xpose.msra.mxu0 0
      %228 = vmatprep.subr.bf16.mxu0 0
      %229 = vmatpush1.bf16.xpose.msra.mxu0 0
      %230 = vmatprep.subr.bf16.mxu0 0
      %231 = vmatpush1.bf16.xpose.msra.mxu0 0
      %232 = vmatprep.mubr.bf16.mxu0 0
      %233 = vmatmul.mubr.bf16.gmra.mrb[0].mxu0 %v195
      %v234 = vpop.f32.mrb[0].mxu0
      %v235 = vadd.f32 0.0, %v234
      %v236 = vpop.f32.mrb[0].mxu0
      %v237 = vpop.f32.mrb[0].mxu0
      %v238 = vadd.f32 0.0, %v237
      %v239 = vpop.f32.mrb[0].mxu0
      %240 = vdwg.mxu0
      %v241 = vstv %s123
      %v242 = vmul.f32 %v235, %v241
      %v243 = vmul.f32 %v238, %v241
      %v244 = vld [vmem:[%s5] sm:$0xff]
      %v245 = vld [vmem:[%s5 + $0x8] sm:$0xff]
      %v246 = vsub.f32 %v242, %v244
      %v247 = vsub.f32 %v243, %v245
      %v248 = vmul.f32 %v246, %v246
      %v249 = vmul.f32 %v247, %v247
      %vm250 = vcmask 523264
      %v251 = vsel %vm250, %v248, 0.0
      %v252 = vsel %vm250, %v249, 0.0
      %v253 = vadd.f32 %v251, %v252
      %254 = vadd.xlane.f32.xlu0 %v253
      %v255 = vpop.xlane.xlu0 %254
      %v256 = vrot.slane %v255, 4
      %v257 = vadd.f32 %v255, %v256
      %v258 = vrot.slane %v257, 2
      %v259 = vadd.f32 %v257, %v258
      %v260 = vrot.slane %v259, 1
      %v261 = vadd.f32 %v259, %v260
      %s262 = vtos %v261
      %v263 = vstv %s116
      %vm264 = vcmp.eq.s32.totalorder %v114, %v263
      %v265 = vstv %s262
      %v266 = vsel %vm264, %v265, 0.0
      %v267 = vadd.f32 %v121, %v266
    $region62: #{tpu_custom_call.1} parent=1 // loop_footer
      %s118 = sadd.s32 %s116, 1
    $region63: #{tpu_custom_call.1} parent=1 // loop_footer_branch
      %115 = sbr.rel target = $region59
    $region64: #{tpu_custom_call.1} parent=1 // loop_exit
      _
    %268 = vst [vmem:[#allocation15] sm:$0x1] %v121
    // Predicated region
    $region65: #{tpu_custom_call.1} parent=1 // pred_check
      _
    $region66: #{tpu_custom_call.1} parent=1 // pred_check_branch
      %270 = sbr.rel (0) target = $region68
    $region67: #{tpu_custom_call.1} parent=1 // pred_region
      %s272 = ssub.s32 16, 16
      %273 = vsyncadd [#allocation5], %s272
      %s275 = sshll.u32 [#allocation15], 4
      %s276 = int_to_ptr.vmem [resolvable:$true] %s275
      %278 = dma.vmem_to_hbm [thread:$0]  %s276, 16, %s8, [#allocation5]
    $region68: #{tpu_custom_call.1} parent=1 // pred_fallthru
      _
    // Predicated region
    $region69: #{tpu_custom_call.1} parent=1 // pred_check
      _
    $region70: #{tpu_custom_call.1} parent=1 // pred_check_branch
      %280 = sbr.rel (0) target = $region72
    $region71: #{tpu_custom_call.1} parent=1 // pred_region
      %281 = dma.done [#allocation5], 16
    $region72: #{tpu_custom_call.1} parent=1 // pred_fallthru
      _
    %282 = vsyncpa [#allocation4], 1
    %283 = vsyncpa [#allocation11], 1
    %284 = vsyncpa [#allocation14], 1
    %285 = vsyncpa [#allocation5], 1
    %286 = vsyncpa [#allocation6], 1
    %287 = vsyncpa [#allocation8], 1

</llo_original>
